<compile_context>
chip_gen: v7x
topology: tpu7x:2x2x1
jax: 0.10.0
libtpu: 0.0.40
codegen_flags: <defaults>
</compile_context>

<pallas_src>
import functools

import jax
import jax.numpy as jnp
import numpy as np
from jax.experimental import pallas as pl
from jax.experimental.pallas import tpu as pltpu


def _translate_kernel(shift_ref, x_ref, o_ref, *, axis, width, fill):
    """Translate a block of flattened image planes by `shift` pixels.

    Each row of the (P, H*W) block is one image plane flattened row-major.
    torchvision semantics (F.affine with translate, NEAREST, integer level):
      axis == 0 (horizontal): out[:, c] = x[:, c - shift]
      axis == 1 (vertical):   out[r, :] = x[r - shift, :]
    Out-of-range source pixels take the fill value.
    """
    shift = shift_ref[0]                       # dynamic int32 scalar (SMEM)
    x = x_ref[...]                             # (P, H*W), native dtype
    hw = x.shape[-1]

    # Flattened-plane index along the lane dimension.
    pos = jax.lax.broadcasted_iota(jnp.int32, x.shape, 1)
    if axis == 0:                              # shift along W (columns)
        src = pos % width - shift              # source column per output pixel
        size = width
        roll_amt = shift
    else:                                      # shift along H (rows)
        src = pos // width - shift             # source row per output pixel
        size = hw // width
        roll_amt = shift * width

    # Lane rotation of each flattened plane (XLU; rows are independent).
    rolled = pltpu.roll(x, jnp.mod(roll_amt, hw), axis=1)
    valid = (src >= 0) & (src < size)
    o_ref[...] = jnp.where(valid, rolled, jnp.array(fill, dtype=x.dtype))


def _planes_per_block(num_planes, plane_bytes, target_bytes=2 << 20):
    """Largest whole-block plane count with block size roughly <= target."""
    p = int(max(1, min(num_planes, target_bytes // max(plane_bytes, 1))))
    # Prefer a divisor of num_planes that is sublane-friendly (mult of 8) or
    # covers the whole axis.
    for cand in range(p, 0, -1):
        if num_planes % cand == 0 and (cand % 8 == 0 or cand == num_planes):
            return cand
    for cand in range(p, 0, -1):
        if num_planes % cand == 0:
            return cand
    return 1


def translate(img, level, *, axis, random_direction=True, fill=0.0, key=None):
    """Pallas equivalent of Translate.forward(img, level) for NCHW tensors."""
    if axis not in (0, 1):
        raise ValueError("Axis must be 0 or 1.")
    level = jnp.asarray(level, jnp.int32)
    if random_direction:
        # torch: `if torch.rand(1).item() > 0.5: level = -level`
        # TODO(synk): key=None uses a fixed PRNGKey(0) (deterministic), unlike
        # torch's fresh per-call torch.rand(1); pass a key for real randomness.
        if key is None:
            key = jax.random.PRNGKey(0)
        flip = jax.random.uniform(key) > 0.5
        level = jnp.where(flip, -level, level)
    shift = level.reshape((1,))

    N, C, H, W = img.shape
    nc = N * C
    x2 = img.reshape(nc, H * W)            # contiguous view; lane-dense last dim

    plane_bytes = H * W * img.dtype.itemsize
    p = _planes_per_block(nc, plane_bytes)
    grid = (nc // p,)

    kernel = functools.partial(_translate_kernel, axis=axis, width=W,
                               fill=float(fill))
    out = pl.pallas_call(
        kernel,
        out_shape=jax.ShapeDtypeStruct((nc, H * W), img.dtype),
        grid_spec=pltpu.PrefetchScalarGridSpec(
            num_scalar_prefetch=1,
            grid=grid,
            in_specs=[pl.BlockSpec((p, H * W), lambda i, s: (i, 0))],
            out_specs=pl.BlockSpec((p, H * W), lambda i, s: (i, 0)),
        ),
        compiler_params=pltpu.CompilerParams(
            dimension_semantics=("parallel",)),
    )(shift, x2)
    return out.reshape(N, C, H, W)


def _reference(img, shift, axis, fill=0.0):
    """NumPy reference of the NEAREST integer translate (torchvision semantics)."""
    img = np.asarray(img)
    out = np.full_like(img, fill)
    s = int(shift)
    _, _, H, W = img.shape
    if axis == 0:
        for c_out in range(W):
            c_in = c_out - s
            if 0 <= c_in < W:
                out[..., c_out] = img[..., c_in]
    else:
        for r_out in range(H):
            r_in = r_out - s
            if 0 <= r_in < H:
                out[..., r_out, :] = img[..., r_in, :]
    return out


if __name__ == "__main__":
    key = jax.random.PRNGKey(0)
    k_img, k_dir = jax.random.split(key)
    x = jax.random.normal(k_img, (2, 4, 16, 16), dtype=jnp.float32)

    # Deterministic checks: both axes, both signs, and |shift| > image size
    # (entire output becomes fill).  Translation is pure data movement now, so
    # results must be bit-exact.
    for axis in (0, 1):
        for lvl in (3, -3, 20):
            out = jax.block_until_ready(
                translate(x, lvl, axis=axis, random_direction=False))
            np.testing.assert_array_equal(np.asarray(out),
                                          _reference(x, lvl, axis))

    # Rectangular planes (H != W), still lane-dense (H*W multiple of 128).
    x_rect = jax.random.normal(k_img, (2, 2, 8, 32), dtype=jnp.float32)
    for axis in (0, 1):
        out = jax.block_until_ready(
            translate(x_rect, 5, axis=axis, random_direction=False))
        np.testing.assert_array_equal(np.asarray(out),
                                      _reference(x_rect, 5, axis))

    # Random-direction path (sign chosen from k_dir, mirroring wrapper logic).
    out_rd = jax.block_until_ready(
        translate(x, 3, axis=0, random_direction=True, key=k_dir))
    flip = bool(jax.random.uniform(k_dir) > 0.5)
    np.testing.assert_array_equal(np.asarray(out_rd),
                                  _reference(x, -3 if flip else 3, axis=0))

    # TODO(synk): PIL.Image inputs, non-NEAREST interpolation and the `center`
    # argument of F.affine are out of scope for this integer-shift kernel.
    print("KERNEL_OK")
</pallas_src>

<mosaic_0001>
module attributes {stable_mosaic.version = 11 : i64} {
  func.func @_translate_kernel(%arg0: i32, %arg1: memref<1xi32, #tpu.memory_space<smem>>, %arg2: memref<8x256xf32, #tpu.memory_space<vmem>>, %arg3: memref<8x256xf32, #tpu.memory_space<vmem>>) attributes {dimension_semantics = [#tpu.dimension_semantics<parallel>], iteration_bounds = array<i64: 1>, scalar_prefetch = 1 : i64, scratch_operands = 0 : i64, tpu.core_type = #tpu.core_type<tc>, window_params = [{transform_indices = @transform_0, window_bounds = array<i64: 8, 256>}, {transform_indices = @transform_1, window_bounds = array<i64: 8, 256>}]} {
    %c0 = arith.constant 0 : index
    %0 = memref.load %arg1[%c0] : memref<1xi32, #tpu.memory_space<smem>>
    %c0_0 = arith.constant 0 : index
    %c0_1 = arith.constant 0 : index
    %1 = vector.load %arg2[%c0_0, %c0_1] : memref<8x256xf32, #tpu.memory_space<vmem>>, vector<8x256xf32>
    %2 = tpu.iota {dimensions = array<i32: 1>} : vector<8x256xi32>
    %c16_i32 = arith.constant 16 : i32
    %c0_i32 = arith.constant 0 : i32
    %3 = arith.cmpi eq, %c16_i32, %c0_i32 : i32
    %c1_i32 = arith.constant 1 : i32
    %4 = arith.select %3, %c1_i32, %c16_i32 : i32
    %5 = vector.broadcast %4 : i32 to vector<8x256xi32>
    %6 = arith.remsi %2, %5 : vector<8x256xi32>
    %c0_i32_2 = arith.constant 0 : i32
    %7 = vector.broadcast %c0_i32_2 : i32 to vector<8x256xi32>
    %8 = arith.cmpi ne, %6, %7 : vector<8x256xi32>
    %c0_i32_3 = arith.constant 0 : i32
    %9 = vector.broadcast %c0_i32_3 : i32 to vector<8x256xi32>
    %10 = arith.cmpi slt, %6, %9 : vector<8x256xi32>
    %c0_i32_4 = arith.constant 0 : i32
    %11 = arith.cmpi slt, %4, %c0_i32_4 : i32
    %12 = vector.broadcast %11 : i1 to vector<8x256xi1>
    %13 = vector.broadcast %12 : vector<8x256xi1> to vector<8x256xi1>
    %14 = arith.xori %10, %13 : vector<8x256xi1>
    %15 = arith.andi %14, %8 : vector<8x256xi1>
    %16 = vector.broadcast %4 : i32 to vector<8x256xi32>
    %17 = arith.addi %6, %16 : vector<8x256xi32>
    %18 = arith.select %15, %17, %6 : vector<8x256xi1>, vector<8x256xi32>
    %19 = vector.broadcast %0 : i32 to vector<8x256xi32>
    %20 = arith.subi %18, %19 : vector<8x256xi32>
    %c256_i32 = arith.constant 256 : i32
    %c0_i32_5 = arith.constant 0 : i32
    %21 = arith.cmpi eq, %c256_i32, %c0_i32_5 : i32
    %c1_i32_6 = arith.constant 1 : i32
    %22 = arith.select %21, %c1_i32_6, %c256_i32 : i32
    %23 = arith.remsi %0, %22 : i32
    %c0_i32_7 = arith.constant 0 : i32
    %24 = arith.cmpi ne, %23, %c0_i32_7 : i32
    %c0_i32_8 = arith.constant 0 : i32
    %25 = arith.cmpi slt, %23, %c0_i32_8 : i32
    %c0_i32_9 = arith.constant 0 : i32
    %26 = arith.cmpi slt, %22, %c0_i32_9 : i32
    %27 = arith.xori %25, %26 : i1
    %28 = arith.andi %27, %24 : i1
    %29 = arith.addi %23, %22 : i32
    %30 = arith.select %28, %29, %23 : i32
    %31 = tpu.dynamic_rotate %1 by %30 dim 1 : vector<8x256xf32>, i32 -> vector<8x256xf32>
    %c0_i32_10 = arith.constant 0 : i32
    %32 = vector.broadcast %c0_i32_10 : i32 to vector<8x256xi32>
    %33 = arith.cmpi sge, %20, %32 : vector<8x256xi32>
    %c16_i32_11 = arith.constant 16 : i32
    %34 = vector.broadcast %c16_i32_11 : i32 to vector<8x256xi32>
    %35 = arith.cmpi slt, %20, %34 : vector<8x256xi32>
    %36 = arith.andi %33, %35 : vector<8x256xi1>
    %cst = arith.constant 0.000000e+00 : f32
    %37 = vector.broadcast %cst : f32 to vector<8x256xf32>
    %38 = arith.select %36, %31, %37 : vector<8x256xi1>, vector<8x256xf32>
    %c0_12 = arith.constant 0 : index
    %c0_13 = arith.constant 0 : index
    %39 = vector.load %arg3[%c0_12, %c0_13] : memref<8x256xf32, #tpu.memory_space<vmem>>, vector<8x256xf32>
    tpu.vector_store %arg3[%c0_12, %c0_13], %38 {strides = array<i32>} : memref<8x256xf32, #tpu.memory_space<vmem>>, vector<8x256xf32>,
    return
  }
  func.func @transform_0(%arg0: i32, %arg1: memref<1xi32, #tpu.memory_space<smem>>) -> (i32, i32) {
    %c0_i32 = arith.constant 0 : i32
    %c0_i32_0 = arith.constant 0 : i32
    return %arg0, %c0_i32 : i32, i32
  }
  func.func @transform_1(%arg0: i32, %arg1: memref<1xi32, #tpu.memory_space<smem>>) -> (i32, i32) {
    %c0_i32 = arith.constant 0 : i32
    %c0_i32_0 = arith.constant 0 : i32
    return %arg0, %c0_i32 : i32, i32
  }
}

</mosaic_0001>

<llo_original>
// kernel: tpu_custom_call.1
$region0: #{tpu_custom_call.1}
  #allocation0 [shape = 'u32[]', space=smem, size = 0x4, offset = 0x4, fixed_abs, tag = 'smem constant byte address 0x4 - core index']
  #allocation1 [shape = 'u32[144,128]{1,0:T(1,128)}', space=vmem, size = 0x12000, scoped, tag = 'internal scratch']
  #allocation2 [shape = 's32[1]{0}', space=sflag, size = 0x4, scoped, tag = 'scoped memory for tpu_custom_call.1']
  #allocation3 [shape = 's32[1]{0:T(128)S(6)}', space=smem, size = 0x200, scoped, tag = 'prefetched SMEM operand 0']
  %s0 = inlined_call_operand.<no memory space> [shape: s32[1], index: 0, kind: input, shape index: {}]
  %s1 = inlined_call_operand.hbm [shape: f32[8,256], index: 1, kind: input, shape index: {}]
  %s2 = inlined_call_operand.hbm [shape: f32[8,256], index: 2, kind: output, shape index: {}]
  %s3 = sld [smem:[#allocation0]]
  $region18: #{tpu_custom_call.1} parent=0
    _
  %s5 = ssub.s32 1, %s3
  %s6 = scalar_select 0, %s5, %s3
  %7 = sst [smem:[#allocation3]] %s0
  $region1: #{tpu_custom_call.1} parent=0
    #allocation4 [shape = 'u8[8192]{0}', space=vmem, size = 0x2000, scoped, tag = 'input window, operand 1, single buffered']
    #allocation5 [shape = 's32[1]{0}', space=sflag, size = 0x4, scoped, tag = 'scoped memory for tpu_custom_call.1']
    #allocation6 [shape = 's32[1]{0}', space=sflag, size = 0x4, scoped, tag = 'scoped memory for tpu_custom_call.1']
    #allocation7 [shape = 'u8[8192]{0}', space=vmem, size = 0x2000, scoped, tag = 'output window, operand 0, single buffered']
    %8 = vsyncpa [#allocation5], 0
    %9 = vsyncpa [#allocation6], 0
    // Predicated region
    $region2: #{tpu_custom_call.1} parent=1 // pred_check
      _
    $region3: #{tpu_custom_call.1} parent=1 // pred_check_branch
      %11 = sbr.rel (0) target = $region5
    $region4: #{tpu_custom_call.1} parent=1 // pred_region
      %s13 = ssub.s32 256, 256
      %14 = vsyncadd [#allocation5], %s13
      %s16 = sshll.u32 [#allocation4], 4
      %s17 = int_to_ptr.vmem [resolvable:$true] %s16
      %19 = dma.hbm_to_vmem [thread:$0]  %s1, 256, %s17, [#allocation5]
    $region5: #{tpu_custom_call.1} parent=1 // pred_fallthru
      _
    // Predicated region
    $region6: #{tpu_custom_call.1} parent=1 // pred_check
      _
    $region7: #{tpu_custom_call.1} parent=1 // pred_check_branch
      %21 = sbr.rel (0) target = $region9
    $region8: #{tpu_custom_call.1} parent=1 // pred_region
      %22 = dma.done [#allocation5], 256
    $region9: #{tpu_custom_call.1} parent=1 // pred_fallthru
      _
    %s23 = sld [smem:[#allocation3]]
    %v24 = vld [vmem:[#allocation4] sm:$0xff]
    %v25 = vld [vmem:[#allocation4 + $0x8] sm:$0xff]
    %v26 = vlaneseq
    %v27 = vand.u32 %v26, 127
    %v28 = vadd.s32 %v27, 128
    %vm29 = vcmp.lt.s32.totalorder %v27, 0
    %v30 = vsub.s32 0, %v27
    %v31 = vsel %vm29, %v30, %v27
    %v32 = vshrl.u32 %v31, 4
    %v33 = vand.u32 %v31, 15
    %v34 = vsub.s32 0, %v33
    %v35 = vsel %vm29, %v34, %v33
    %vm36 = vcmp.lt.s32.totalorder %v28, 0
    %v37 = vsub.s32 0, %v28
    %v38 = vsel %vm36, %v37, %v28
    %v39 = vshrl.u32 %v38, 4
    %v40 = vand.u32 %v38, 15
    %v41 = vsub.s32 0, %v40
    %v42 = vsel %vm36, %v41, %v40
    %vm43 = vcmp.ne.s32.totalorder %v35, 0
    %vm44 = vcmp.ne.s32.totalorder %v42, 0
    %vm45 = vcmp.lt.s32.totalorder %v35, 0
    %vm46 = vcmp.lt.s32.totalorder %v42, 0
    %vm47 = vmand %vm45, %vm43
    %vm48 = vmand %vm46, %vm44
    %v49 = vadd.s32 %v35, 16
    %v50 = vadd.s32 %v42, 16
    %v51 = vsel %vm47, %v49, %v35
    %v52 = vsel %vm48, %v50, %v42
    %v53 = vstv %s23
    %v54 = vsub.s32 %v51, %v53
    %v55 = vsub.s32 %v52, %v53
    %p56 = scmp.lt.s32.totalorder %s23, 0
    %s57 = ssub.s32 0, %s23
    %s58 = scalar_select %p56, %s57, %s23
    %s59 = sand.u32 %s58, 255
    %s60 = ssub.s32 0, %s59
    %s61 = scalar_select %p56, %s60, %s59
    %p62 = scmp.ne.s32.totalorder %s61, 0
    %p63 = scmp.lt.s32.totalorder %s61, 0
    %p64 = pnand %p63, %p62
    %p65 = pneg %p64
    %s66 = sadd.s32 %s61, 256
    %s67 = scalar_select %p65, %s66, %s61
    %s68 = sand.u32 %s67, 255
    %s69 = sand.u32 %s68, 127
    %s70 = sshrl.u32 %s68, 7
    %71 = vrot.lane.b32.xlu0 %v24, %s69
    %v72 = vpop.permute.xlu0 %71
    %73 = vrot.lane.b32.xlu0 %v25, %s69
    %v74 = vpop.permute.xlu0 %73
    %v75 = vstv %s69
    %vm76 = vcmp.lt.s32.totalorder %v27, %v75
    %v77 = vsel %vm76, %v72, %v74
    %v78 = vsel %vm76, %v74, %v72
    %s79 = sand.u32 %s70, 1
    %v80 = vstv %s79
    %vm81 = vcmp.ne.s32.totalorder %v80, 0
    %v82 = vsel %vm81, %v77, %v78
    %v83 = vsel %vm81, %v78, %v77
    %vm84 = vcmp.ge.s32.totalorder %v54, 0
    %vm85 = vcmp.ge.s32.totalorder %v55, 0
    %vm86 = vcmp.lt.s32.totalorder %v54, 16
    %vm87 = vcmp.lt.s32.totalorder %v55, 16
    %vm88 = vmand %vm84, %vm86
    %vm89 = vmand %vm85, %vm87
    %v90 = vsel %vm88, %v82, 0.0
    %v91 = vsel %vm89, %v83, 0.0
    %92 = vst [vmem:[#allocation7] sm:$0xff] %v90
    %93 = vst [vmem:[#allocation7 + $0x8] sm:$0xff] %v91
    // Predicated region
    $region10: #{tpu_custom_call.1} parent=1 // pred_check
      _
    $region11: #{tpu_custom_call.1} parent=1 // pred_check_branch
      %95 = sbr.rel (0) target = $region13
    $region12: #{tpu_custom_call.1} parent=1 // pred_region
      %s97 = ssub.s32 256, 256
      %98 = vsyncadd [#allocation6], %s97
      %s100 = sshll.u32 [#allocation7], 4
      %s101 = int_to_ptr.vmem [resolvable:$true] %s100
      %103 = dma.vmem_to_hbm [thread:$0]  %s101, 256, %s2, [#allocation6]
    $region13: #{tpu_custom_call.1} parent=1 // pred_fallthru
      _
    // Predicated region
    $region14: #{tpu_custom_call.1} parent=1 // pred_check
      _
    $region15: #{tpu_custom_call.1} parent=1 // pred_check_branch
      %105 = sbr.rel (0) target = $region17
    $region16: #{tpu_custom_call.1} parent=1 // pred_region
      %106 = dma.done [#allocation6], 256
    $region17: #{tpu_custom_call.1} parent=1 // pred_fallthru
      _
    %107 = vsyncpa [#allocation5], 1
    %108 = vsyncpa [#allocation6], 1

</llo_original>
